<compile_context>
chip_gen: v7x
topology: tpu7x:2x2x1
jax: 0.10.0
libtpu: 0.0.40
codegen_flags: <defaults>
</compile_context>

<pallas_src>
import functools

import jax
import jax.numpy as jnp
from jax.experimental import pallas as pl
from jax.experimental.pallas import tpu as pltpu


# ------------------------------ kernel --------------------------------------
def block_kernel(x_ref, wt_ref, tb_ref, g1_ref, g2_ref,
                 w1_ref, b1_ref, w2_ref, b2_ref, o_ref,
                 *, bb, seq_len, t_blk, m_chunk, mxu_dtype):
    eps = jnp.float32(jnp.finfo(jnp.float32).eps)    # RMSNorm(eps=None)

    x = x_ref[...]                                   # (bb*T, E) f32

    # ---- RMSNorm 1 ----
    ms1 = jnp.mean(x * x, axis=-1, keepdims=True)
    h1 = x * jax.lax.rsqrt(ms1 + eps) * g1_ref[...]  # (1,E) row broadcast
    h1m = h1.astype(mxu_dtype)

    # ---- Toeplitz mixer (block-lower-triangular) + bias + residual 1 ----
    # Wt[t, s] = weight[t - s] for t >= s (pre-transposed in the wrapper), so
    # mix_b = Wt @ h1_b.  Only blocks on/below the diagonal are non-zero.
    n_tb = seq_len // t_blk
    for b in range(bb):                              # static loops, aligned slices
        base = b * seq_len
        for r in range(n_tb):
            r0 = r * t_blk
            acc = jnp.dot(wt_ref[r0:r0 + t_blk, 0:t_blk],
                          h1m[base:base + t_blk, :],
                          preferred_element_type=jnp.float32)
            for c in range(1, r + 1):
                c0 = c * t_blk
                acc = acc + jnp.dot(wt_ref[r0:r0 + t_blk, c0:c0 + t_blk],
                                    h1m[base + c0:base + c0 + t_blk, :],
                                    preferred_element_type=jnp.float32)
            # bias is a (T,1) column -> pure lane broadcast; write straight
            # into the output tile (doubles as the x1 staging buffer).
            o_ref[base + r0:base + r0 + t_blk, :] = (
                x[base + r0:base + r0 + t_blk, :] + acc
                + tb_ref[r0:r0 + t_blk, :])

    x1 = o_ref[...]                                  # residual-1 result (f32)

    # ---- RMSNorm 2 ----
    ms2 = jnp.mean(x1 * x1, axis=-1, keepdims=True)
    h2 = (x1 * jax.lax.rsqrt(ms2 + eps) * g2_ref[...]).astype(mxu_dtype)

    # ---- MLP: fc1 -> SiLU -> fc2, chunked over hidden dim M ----
    mlp_dim = w1_ref.shape[1]
    macc = None
    for c in range(mlp_dim // m_chunk):
        c0 = c * m_chunk
        u = jnp.dot(h2, w1_ref[:, c0:c0 + m_chunk],
                    preferred_element_type=jnp.float32) + b1_ref[:, c0:c0 + m_chunk]
        a = (u * jax.nn.sigmoid(u)).astype(mxu_dtype)      # SiLU, cast per-chunk
        p = jnp.dot(a, w2_ref[c0:c0 + m_chunk, :],
                    preferred_element_type=jnp.float32)
        macc = p if macc is None else macc + p

    o_ref[...] = x1 + macc + b2_ref[...]             # residual 2


# --------------------------- wrapper helpers ---------------------------------
def build_toeplitz_matrix(toep_weight, seq_len):
    """Pre-transposed causal Toeplitz matrix: Wt[t, s] = weight[t - s], t >= s."""
    idx = jnp.arange(seq_len)
    diff = idx[:, None] - idx[None, :]               # t - s
    return jnp.where(diff >= 0,
                     toep_weight[:seq_len][jnp.clip(diff, 0, seq_len - 1)],
                     0.0).astype(jnp.float32)


def _pick_batch_block(B, T, target_rows=512):
    """Largest divisor of B with bb*T <= target_rows, keeping >=2 grid steps."""
    divisors = [d for d in range(1, B + 1) if B % d == 0]
    cap = max(1, target_rows // T)
    cands = [d for d in divisors if d <= cap] or [1]
    bb = max(cands)
    if B // bb < 2:                                  # keep both v7x TCs busy
        two_step = [d for d in cands if B // d >= 2]
        if two_step:
            bb = max(two_step)
    return bb


# ------------------------------ wrapper --------------------------------------
@functools.partial(jax.jit, static_argnames=("mxu_dtype", "batch_block"))
def block_forward(x, toep_weight, toep_bias, g1, g2, w1, b1, w2, b2,
                  *, mxu_dtype=jnp.bfloat16, batch_block=None,
                  toeplitz_matrix=None):
    """x: (B, T, E) float32. Linear weights stored (in, out)."""
    B, T, E = x.shape
    M = w1.shape[1]
    if T % 8 != 0:
        raise ValueError("sequence length must be a multiple of 8 (sublane tiling)")
    if toep_weight.shape[0] < T or toep_bias.shape[0] < T:
        raise ValueError("sequence length exceeds Toeplitz parameter length")

    bb = batch_block if batch_block is not None else _pick_batch_block(B, T)
    assert B % bb == 0
    rows = bb * T

    # Static tile choices (multiples of 128 when possible, else full dim).
    t_blk = 128 if (T % 128 == 0) else T             # Toeplitz block size
    m_chunk = next((c for c in (512, 256, 128) if M % c == 0 and M >= c), M)

    # Kernel-ready operands (constant across grid steps; precompute
    # toeplitz_matrix once and pass it in for truly static weights).
    if toeplitz_matrix is None:
        toeplitz_matrix = build_toeplitz_matrix(toep_weight, T)
    wt = toeplitz_matrix.astype(mxu_dtype)           # (T, T)
    tbc = toep_bias[:T].reshape(T, 1).astype(jnp.float32)
    g1_2d = g1.reshape(1, E).astype(jnp.float32)
    g2_2d = g2.reshape(1, E).astype(jnp.float32)
    w1_c = w1.astype(mxu_dtype)                      # (E, M)
    w2_c = w2.astype(mxu_dtype)                      # (M, E)
    b1_2d = b1.reshape(1, M).astype(jnp.float32)
    b2_2d = b2.reshape(1, E).astype(jnp.float32)
    x2d = x.reshape(B * T, E)

    # Explicit scoped-VMEM budget: double-buffered x/out tiles + (double-
    # buffered) constant weights + live intermediates, with 1.5x headroom.
    wbytes = jnp.dtype(mxu_dtype).itemsize
    est = (2 * 2 * rows * E * 4                      # x / out tiles (2x buffered)
           + 2 * (T * T + 2 * E * M) * wbytes        # Wt, fc1, fc2 (2x buffered)
           + 2 * (T + 3 * E + M) * 4                 # bias / gamma rows
           + 5 * rows * E * 4                        # f32 intermediates
           + 2 * rows * E * wbytes                   # h1m / h2 casts
           + 2 * rows * m_chunk * (4 + wbytes))      # per-chunk u / a
    vmem_limit = int(min(max(est * 3 // 2, 32 * 1024 * 1024), 64 * 1024 * 1024))

    out2d = pl.pallas_call(
        functools.partial(block_kernel, bb=bb, seq_len=T, t_blk=t_blk,
                          m_chunk=m_chunk, mxu_dtype=mxu_dtype),
        out_shape=jax.ShapeDtypeStruct((B * T, E), x.dtype),
        grid_spec=pltpu.PrefetchScalarGridSpec(
            num_scalar_prefetch=0,
            grid=(B // bb,),
            in_specs=[
                pl.BlockSpec((rows, E), lambda i: (i, 0)),  # x (batch chunk)
                pl.BlockSpec((T, T), lambda i: (0, 0)),     # Toeplitz W^T
                pl.BlockSpec((T, 1), lambda i: (0, 0)),     # Toeplitz bias col
                pl.BlockSpec((1, E), lambda i: (0, 0)),     # RMSNorm1 gamma
                pl.BlockSpec((1, E), lambda i: (0, 0)),     # RMSNorm2 gamma
                pl.BlockSpec((E, M), lambda i: (0, 0)),     # fc1 weight
                pl.BlockSpec((1, M), lambda i: (0, 0)),     # fc1 bias
                pl.BlockSpec((M, E), lambda i: (0, 0)),     # fc2 weight
                pl.BlockSpec((1, E), lambda i: (0, 0)),     # fc2 bias
            ],
            out_specs=pl.BlockSpec((rows, E), lambda i: (i, 0)),
        ),
        compiler_params=pltpu.CompilerParams(
            dimension_semantics=("parallel",),       # v7x: 2 TCs split the grid
            vmem_limit_bytes=vmem_limit),
    )(x2d, wt, tbc, g1_2d, g2_2d, w1_c, b1_2d, w2_c, b2_2d)

    return out2d.reshape(B, T, E)


# --------------------------- reference (pure JAX) ----------------------------
def block_reference(x, toep_weight, toep_bias, g1, g2, w1, b1, w2, b2):
    B, T, E = x.shape
    eps = jnp.finfo(jnp.float32).eps
    rms = lambda v, g: v * jax.lax.rsqrt(
        jnp.mean(v * v, axis=-1, keepdims=True) + eps) * g
    h1 = rms(x, g1)
    idx = jnp.arange(T)
    diff = idx[None, :] - idx[:, None]               # t - s at [s, t]
    Wm = jnp.where(diff >= 0, toep_weight[:T][jnp.clip(diff, 0, T - 1)], 0.0)
    mix = jnp.einsum('st,bse->bte', Wm, h1) + toep_bias[:T][None, :, None]
    x1 = x + mix
    h2 = rms(x1, g2)
    u = h2 @ w1 + b1
    a = u * jax.nn.sigmoid(u)
    return x1 + (a @ w2 + b2)


# -------------------------------- main ---------------------------------------
if __name__ == "__main__":
    # Small shapes consistent with the module: (B, T, E) plus MLP hidden dim.
    B, T, E, M = 2, 8, 32, 128
    BLOCK_SIZE = 512   # config.block_size (Toeplitz parameter length)

    key = jax.random.PRNGKey(0)
    ks = jax.random.split(key, 8)

    x = jax.random.normal(ks[0], (B, T, E), dtype=jnp.float32)
    toep_weight = 0.1 * jax.random.normal(ks[1], (BLOCK_SIZE,), jnp.float32)
    toep_bias = 0.1 * jax.random.normal(ks[2], (BLOCK_SIZE,), jnp.float32)
    g1 = jnp.ones((E,), jnp.float32)                 # nn.RMSNorm init
    g2 = jnp.ones((E,), jnp.float32)
    w1 = 0.02 * jax.random.normal(ks[3], (E, M), jnp.float32)   # fc1 (in, out)
    b1 = 0.02 * jax.random.normal(ks[4], (M,), jnp.float32)
    w2 = 0.02 * jax.random.normal(ks[5], (M, E), jnp.float32)   # fc2 (in, out)
    b2 = 0.02 * jax.random.normal(ks[6], (E,), jnp.float32)

    ref = block_reference(x, toep_weight, toep_bias, g1, g2, w1, b1, w2, b2)

    # f32 MXU-operand path (tolerance allows for TPU reduced-precision f32 dots).
    out_f32 = block_forward(x, toep_weight, toep_bias, g1, g2, w1, b1, w2, b2,
                            mxu_dtype=jnp.float32)
    out_f32 = jax.block_until_ready(out_f32)
    assert out_f32.shape == (B, T, E)
    assert jnp.allclose(out_f32, ref, atol=1e-2, rtol=1e-2), "f32 path mismatch"

    # bf16 MXU-operand / f32-accumulate path (v6e/v7x perf config).
    out_bf16 = block_forward(x, toep_weight, toep_bias, g1, g2, w1, b1, w2, b2,
                             mxu_dtype=jnp.bfloat16)
    out_bf16 = jax.block_until_ready(out_bf16)
    assert out_bf16.shape == (B, T, E)
    assert jnp.allclose(out_bf16, ref, atol=3e-2, rtol=3e-2), "bf16 path mismatch"

    print("KERNEL_OK")
</pallas_src>

<mosaic_0001>
module attributes {stable_mosaic.version = 11 : i64} {
  func.func @block_kernel(%arg0: i32, %arg1: memref<8x32xf32, #tpu.memory_space<vmem>>, %arg2: memref<8x8xf32, #tpu.memory_space<vmem>>, %arg3: memref<8x1xf32, #tpu.memory_space<vmem>>, %arg4: memref<1x32xf32, #tpu.memory_space<vmem>>, %arg5: memref<1x32xf32, #tpu.memory_space<vmem>>, %arg6: memref<32x128xf32, #tpu.memory_space<vmem>>, %arg7: memref<1x128xf32, #tpu.memory_space<vmem>>, %arg8: memref<128x32xf32, #tpu.memory_space<vmem>>, %arg9: memref<1x32xf32, #tpu.memory_space<vmem>>, %arg10: memref<8x32xf32, #tpu.memory_space<vmem>>) attributes {dimension_semantics = [#tpu.dimension_semantics<parallel>], iteration_bounds = array<i64: 2>, scalar_prefetch = 0 : i64, scratch_operands = 0 : i64, tpu.core_type = #tpu.core_type<tc>, window_params = [{transform_indices = @transform_0, window_bounds = array<i64: 8, 32>}, {pipeline_mode = #tpu.pipeline_mode<synchronous>, transform_indices = @transform_1, window_bounds = array<i64: 8, 8>}, {pipeline_mode = #tpu.pipeline_mode<synchronous>, transform_indices = @transform_2, window_bounds = array<i64: 8, 1>}, {pipeline_mode = #tpu.pipeline_mode<synchronous>, transform_indices = @transform_3, window_bounds = array<i64: 1, 32>}, {pipeline_mode = #tpu.pipeline_mode<synchronous>, transform_indices = @transform_4, window_bounds = array<i64: 1, 32>}, {pipeline_mode = #tpu.pipeline_mode<synchronous>, transform_indices = @transform_5, window_bounds = array<i64: 32, 128>}, {pipeline_mode = #tpu.pipeline_mode<synchronous>, transform_indices = @transform_6, window_bounds = array<i64: 1, 128>}, {pipeline_mode = #tpu.pipeline_mode<synchronous>, transform_indices = @transform_7, window_bounds = array<i64: 128, 32>}, {pipeline_mode = #tpu.pipeline_mode<synchronous>, transform_indices = @transform_8, window_bounds = array<i64: 1, 32>}, {transform_indices = @transform_9, window_bounds = array<i64: 8, 32>}]} {
    %c0 = arith.constant 0 : index
    %c0_0 = arith.constant 0 : index
    %0 = vector.load %arg1[%c0, %c0_0] : memref<8x32xf32, #tpu.memory_space<vmem>>, vector<8x32xf32>
    %1 = arith.mulf %0, %0 : vector<8x32xf32>
    %cst = arith.constant dense<0.000000e+00> : vector<8xf32>
    %2 = vector.multi_reduction <add>, %1, %cst [1] : vector<8x32xf32> to vector<8xf32>
    %3 = vector.shape_cast %2 : vector<8xf32> to vector<8x1xf32>
    %cst_1 = arith.constant 3.200000e+01 : f32
    %4 = vector.broadcast %cst_1 : f32 to vector<8x1xf32>
    %5 = arith.divf %3, %4 : vector<8x1xf32>
    %cst_2 = arith.constant 1.1920929E-7 : f32
    %6 = vector.broadcast %cst_2 : f32 to vector<8x1xf32>
    %7 = arith.addf %5, %6 : vector<8x1xf32>
    %8 = math.rsqrt %7 : vector<8x1xf32>
    %9 = vector.broadcast %8 : vector<8x1xf32> to vector<8x32xf32>
    %10 = arith.mulf %0, %9 : vector<8x32xf32>
    %c0_3 = arith.constant 0 : index
    %c0_4 = arith.constant 0 : index
    %11 = vector.load %arg4[%c0_3, %c0_4] : memref<1x32xf32, #tpu.memory_space<vmem>>, vector<1x32xf32>
    %12 = vector.broadcast %11 : vector<1x32xf32> to vector<8x32xf32>
    %13 = arith.mulf %10, %12 : vector<8x32xf32>
    %c0_5 = arith.constant 0 : index
    %c0_6 = arith.constant 0 : index
    %14 = vector.load %arg2[%c0_5, %c0_6] : memref<8x8xf32, #tpu.memory_space<vmem>>, vector<8x8xf32>
    %cst_7 = arith.constant dense<0.000000e+00> : vector<8x32xf32>
    %15 = tpu.matmul %14, %13, %cst_7 {dimension_numbers = #tpu.dot_dimension_numbers<[1], [0], [0], [1], [0, 0, 1, 1], [], []>} : vector<8x8xf32>, vector<8x32xf32>, vector<8x32xf32> -> vector<8x32xf32>
    %16 = arith.addf %0, %15 : vector<8x32xf32>
    %c0_8 = arith.constant 0 : index
    %c0_9 = arith.constant 0 : index
    %17 = vector.load %arg3[%c0_8, %c0_9] : memref<8x1xf32, #tpu.memory_space<vmem>>, vector<8x1xf32>
    %18 = vector.broadcast %17 : vector<8x1xf32> to vector<8x32xf32>
    %19 = arith.addf %16, %18 : vector<8x32xf32>
    %c0_10 = arith.constant 0 : index
    %c0_11 = arith.constant 0 : index
    %20 = vector.load %arg10[%c0_10, %c0_11] : memref<8x32xf32, #tpu.memory_space<vmem>>, vector<8x32xf32>
    tpu.vector_store %arg10[%c0_10, %c0_11], %19 {strides = array<i32>} : memref<8x32xf32, #tpu.memory_space<vmem>>, vector<8x32xf32>,
    %c0_12 = arith.constant 0 : index
    %c0_13 = arith.constant 0 : index
    %21 = vector.load %arg10[%c0_12, %c0_13] : memref<8x32xf32, #tpu.memory_space<vmem>>, vector<8x32xf32>
    %22 = arith.mulf %21, %21 : vector<8x32xf32>
    %cst_14 = arith.constant dense<0.000000e+00> : vector<8xf32>
    %23 = vector.multi_reduction <add>, %22, %cst_14 [1] : vector<8x32xf32> to vector<8xf32>
    %24 = vector.shape_cast %23 : vector<8xf32> to vector<8x1xf32>
    %cst_15 = arith.constant 3.200000e+01 : f32
    %25 = vector.broadcast %cst_15 : f32 to vector<8x1xf32>
    %26 = arith.divf %24, %25 : vector<8x1xf32>
    %cst_16 = arith.constant 1.1920929E-7 : f32
    %27 = vector.broadcast %cst_16 : f32 to vector<8x1xf32>
    %28 = arith.addf %26, %27 : vector<8x1xf32>
    %29 = math.rsqrt %28 : vector<8x1xf32>
    %30 = vector.broadcast %29 : vector<8x1xf32> to vector<8x32xf32>
    %31 = arith.mulf %21, %30 : vector<8x32xf32>
    %c0_17 = arith.constant 0 : index
    %c0_18 = arith.constant 0 : index
    %32 = vector.load %arg5[%c0_17, %c0_18] : memref<1x32xf32, #tpu.memory_space<vmem>>, vector<1x32xf32>
    %33 = vector.broadcast %32 : vector<1x32xf32> to vector<8x32xf32>
    %34 = arith.mulf %31, %33 : vector<8x32xf32>
    %c0_19 = arith.constant 0 : index
    %c0_20 = arith.constant 0 : index
    %35 = vector.load %arg6[%c0_19, %c0_20] : memref<32x128xf32, #tpu.memory_space<vmem>>, vector<32x128xf32>
    %cst_21 = arith.constant dense<0.000000e+00> : vector<8x128xf32>
    %36 = tpu.matmul %34, %35, %cst_21 {dimension_numbers = #tpu.dot_dimension_numbers<[1], [0], [0], [1], [0, 0, 1, 1], [], []>} : vector<8x32xf32>, vector<32x128xf32>, vector<8x128xf32> -> vector<8x128xf32>
    %c0_22 = arith.constant 0 : index
    %c0_23 = arith.constant 0 : index
    %37 = vector.load %arg7[%c0_22, %c0_23] : memref<1x128xf32, #tpu.memory_space<vmem>>, vector<1x128xf32>
    %38 = vector.broadcast %37 : vector<1x128xf32> to vector<8x128xf32>
    %39 = arith.addf %36, %38 : vector<8x128xf32>
    %40 = arith.negf %39 : vector<8x128xf32>
    %41 = math.exp %40 : vector<8x128xf32>
    %cst_24 = arith.constant 1.000000e+00 : f32
    %42 = vector.broadcast %cst_24 : f32 to vector<8x128xf32>
    %43 = arith.addf %42, %41 : vector<8x128xf32>
    %44 = arith.divf %42, %43 : vector<8x128xf32>
    %45 = arith.mulf %39, %44 : vector<8x128xf32>
    %c0_25 = arith.constant 0 : index
    %c0_26 = arith.constant 0 : index
    %46 = vector.load %arg8[%c0_25, %c0_26] : memref<128x32xf32, #tpu.memory_space<vmem>>, vector<128x32xf32>
    %cst_27 = arith.constant dense<0.000000e+00> : vector<8x32xf32>
    %47 = tpu.matmul %45, %46, %cst_27 {dimension_numbers = #tpu.dot_dimension_numbers<[1], [0], [0], [1], [0, 0, 1, 1], [], []>} : vector<8x128xf32>, vector<128x32xf32>, vector<8x32xf32> -> vector<8x32xf32>
    %48 = arith.addf %21, %47 : vector<8x32xf32>
    %c0_28 = arith.constant 0 : index
    %c0_29 = arith.constant 0 : index
    %49 = vector.load %arg9[%c0_28, %c0_29] : memref<1x32xf32, #tpu.memory_space<vmem>>, vector<1x32xf32>
    %50 = vector.broadcast %49 : vector<1x32xf32> to vector<8x32xf32>
    %51 = arith.addf %48, %50 : vector<8x32xf32>
    %c0_30 = arith.constant 0 : index
    %c0_31 = arith.constant 0 : index
    %52 = vector.load %arg10[%c0_30, %c0_31] : memref<8x32xf32, #tpu.memory_space<vmem>>, vector<8x32xf32>
    tpu.vector_store %arg10[%c0_30, %c0_31], %51 {strides = array<i32>} : memref<8x32xf32, #tpu.memory_space<vmem>>, vector<8x32xf32>,
    return
  }
  func.func @transform_0(%arg0: i32) -> (i32, i32) {
    %c0_i32 = arith.constant 0 : i32
    %c0_i32_0 = arith.constant 0 : i32
    return %arg0, %c0_i32 : i32, i32
  }
  func.func @transform_1(%arg0: i32) -> (i32, i32) {
    %c0_i32 = arith.constant 0 : i32
    %c0_i32_0 = arith.constant 0 : i32
    %c0_i32_1 = arith.constant 0 : i32
    return %c0_i32, %c0_i32_0 : i32, i32
  }
  func.func @transform_2(%arg0: i32) -> (i32, i32) {
    %c0_i32 = arith.constant 0 : i32
    %c0_i32_0 = arith.constant 0 : i32
    %c0_i32_1 = arith.constant 0 : i32
    return %c0_i32, %c0_i32_0 : i32, i32
  }
  func.func @transform_3(%arg0: i32) -> (i32, i32) {
    %c0_i32 = arith.constant 0 : i32
    %c0_i32_0 = arith.constant 0 : i32
    %c0_i32_1 = arith.constant 0 : i32
    return %c0_i32, %c0_i32_0 : i32, i32
  }
  func.func @transform_4(%arg0: i32) -> (i32, i32) {
    %c0_i32 = arith.constant 0 : i32
    %c0_i32_0 = arith.constant 0 : i32
    %c0_i32_1 = arith.constant 0 : i32
    return %c0_i32, %c0_i32_0 : i32, i32
  }
  func.func @transform_5(%arg0: i32) -> (i32, i32) {
    %c0_i32 = arith.constant 0 : i32
    %c0_i32_0 = arith.constant 0 : i32
    %c0_i32_1 = arith.constant 0 : i32
    return %c0_i32, %c0_i32_0 : i32, i32
  }
  func.func @transform_6(%arg0: i32) -> (i32, i32) {
    %c0_i32 = arith.constant 0 : i32
    %c0_i32_0 = arith.constant 0 : i32
    %c0_i32_1 = arith.constant 0 : i32
    return %c0_i32, %c0_i32_0 : i32, i32
  }
  func.func @transform_7(%arg0: i32) -> (i32, i32) {
    %c0_i32 = arith.constant 0 : i32
    %c0_i32_0 = arith.constant 0 : i32
    %c0_i32_1 = arith.constant 0 : i32
    return %c0_i32, %c0_i32_0 : i32, i32
  }
  func.func @transform_8(%arg0: i32) -> (i32, i32) {
    %c0_i32 = arith.constant 0 : i32
    %c0_i32_0 = arith.constant 0 : i32
    %c0_i32_1 = arith.constant 0 : i32
    return %c0_i32, %c0_i32_0 : i32, i32
  }
  func.func @transform_9(%arg0: i32) -> (i32, i32) {
    %c0_i32 = arith.constant 0 : i32
    %c0_i32_0 = arith.constant 0 : i32
    return %arg0, %c0_i32 : i32, i32
  }
}

</mosaic_0001>

<llo_original>
// kernel: block_forward.1
$region0: #{block_forward.1}
  #allocation0 [shape = 'u32[]', space=smem, size = 0x4, offset = 0x4, fixed_abs, tag = 'smem constant byte address 0x4 - core index']
  #allocation1 [shape = 'u32[144,128]{1,0:T(1,128)}', space=vmem, size = 0x12000, scoped, tag = 'internal scratch']
  %s0 = inlined_call_operand.vmem [shape: f32[16,32], index: 0, kind: input, shape index: {}]
  %s1 = inlined_call_operand.vmem [shape: f32[8,8], index: 1, kind: input, shape index: {}]
  %s2 = inlined_call_operand.vmem [shape: f32[8,1], index: 2, kind: input, shape index: {}]
  %s3 = inlined_call_operand.vmem [shape: f32[1,32], index: 3, kind: input, shape index: {}]
  %s4 = inlined_call_operand.vmem [shape: f32[1,32], index: 4, kind: input, shape index: {}]
  %s5 = inlined_call_operand.vmem [shape: f32[32,128], index: 5, kind: input, shape index: {}]
  %s6 = inlined_call_operand.vmem [shape: f32[1,128], index: 6, kind: input, shape index: {}]
  %s7 = inlined_call_operand.vmem [shape: f32[128,32], index: 7, kind: input, shape index: {}]
  %s8 = inlined_call_operand.vmem [shape: f32[1,32], index: 8, kind: input, shape index: {}]
  %s9 = inlined_call_operand.hbm [shape: f32[16,32], index: 9, kind: output, shape index: {}]
  %s10 = sld [smem:[#allocation0]]
  $region69: #{block_forward.1} parent=0
    _
  %s12 = ssub.s32 1, %s10
  %s13 = scalar_select 0, %s12, %s10
  $region1: #{block_forward.1} parent=0
    #allocation2 [shape = 'u8[8192]{0}', space=vmem, size = 0x2000, scoped, tag = 'output window, operand 0']
    #allocation3 [shape = 's32[2]{0}', space=sflag, size = 0x8, scoped, tag = 'scoped memory for block_forward.1']
    %14 = vsyncpa [#allocation3], 0
    %s15 = scalar_lea.sflag [#allocation3], 1
    %16 = vsyncpa %s15, 0
    loop: start=0, step=1, limit=4
    $region2: #{block_forward.1} parent=1 // loop_pre_header
      _
    $region3: #{block_forward.1} parent=1 // loop_header
      %s18 = sphi 0, %s22
      %p19 = scmp.ge.s32.totalorder %s18, 4
      %s28 = sphi 0, %s30
      %s31 = sphi 0, %s28
      %s32 = sphi 0, %s31
      %s48 = sphi 0, %s32
      %s52 = sphi 0, %s52
      %s54 = sphi 0, %s52
      %s55 = sphi 0, %s54
      %s69 = sphi 0, %s55
      %s73 = sphi 0, %s73
      %s75 = sphi 0, %s73
      %s76 = sphi 0, %s75
      %s90 = sphi 0, %s76
      %s94 = sphi 0, %s94
      %s96 = sphi 0, %s94
      %s97 = sphi 0, %s96
      %s111 = sphi 0, %s97
      %s115 = sphi 0, %s115
      %s117 = sphi 0, %s115
      %s118 = sphi 0, %s117
      %s132 = sphi 0, %s118
      %s136 = sphi 0, %s136
      %s138 = sphi 0, %s136
      %s139 = sphi 0, %s138
      %s153 = sphi 0, %s139
      %s157 = sphi 0, %s157
      %s159 = sphi 0, %s157
      %s160 = sphi 0, %s159
      %s174 = sphi 0, %s160
      %s178 = sphi 0, %s178
      %s180 = sphi 0, %s178
      %s181 = sphi 0, %s180
      %s195 = sphi 0, %s181
      %s199 = sphi 0, %s199
      %s201 = sphi 0, %s199
      %s202 = sphi 0, %s201
      %s216 = sphi 0, %s202
      %s222 = sphi 0, %s224
      %s225 = sphi 0, %s222
      %s226 = sphi 0, %s225
      %s242 = sphi 0, %s226
    $region4: #{block_forward.1} parent=1 // loop_header_branch
      %21 = sbr.rel (%p19) target = $region8
    $region5: #{block_forward.1} parent=1 // loop_body
      %s23 = ssub.s32 %s18, 1
      %s24 = ssub.s32 %s18, 2
      %s25 = sadd.s32 %s18, 1
      %s26 = ssub.s32 %s18, %s25
      %p27 = scmp.eq.s32.totalorder %s26, 0
      %s29 = sadd.s32 %s28, 1
      %s30 = scalar_select %p27, %s28, %s29
      %p33 = pneg %p27
      %p34 = scmp.eq.s32.totalorder %s18, 1
      %p35 = por %p33, %p34
      %p36 = scmp.ne.s32.totalorder %s28, %s31
      %p37 = scmp.eq.s32.totalorder %s18, 0
      %p38 = por %p36, %p37
      %p39 = scmp.ne.s32.totalorder %s28, %s31
      %p40 = scmp.eq.s32.totalorder %s23, 1
      %p41 = por %p39, %p40
      %p42 = scmp.ne.s32.totalorder %s31, %s32
      %p43 = scmp.eq.s32.totalorder %s23, 0
      %p44 = por %p42, %p43
      %p45 = scmp.ne.s32.totalorder %s31, %s32
      %p46 = scmp.eq.s32.totalorder %s24, 1
      %p47 = por %p45, %p46
      %p49 = scmp.ne.s32.totalorder %s32, %s48
      %p50 = scmp.eq.s32.totalorder %s24, 0
      %p51 = por %p49, %p50
      %s53 = sadd.s32 %s52, 1
      %p56 = scmp.eq.s32.totalorder %s18, 1
      %p57 = scmp.ne.s32.totalorder %s52, %s54
      %p58 = scmp.eq.s32.totalorder %s18, 0
      %p59 = por %p57, %p58
      %p60 = scmp.ne.s32.totalorder %s52, %s54
      %p61 = scmp.eq.s32.totalorder %s23, 1
      %p62 = por %p60, %p61
      %p63 = scmp.ne.s32.totalorder %s54, %s55
      %p64 = scmp.eq.s32.totalorder %s23, 0
      %p65 = por %p63, %p64
      %p66 = scmp.ne.s32.totalorder %s54, %s55
      %p67 = scmp.eq.s32.totalorder %s24, 1
      %p68 = por %p66, %p67
      %p70 = scmp.ne.s32.totalorder %s55, %s69
      %p71 = scmp.eq.s32.totalorder %s24, 0
      %p72 = por %p70, %p71
      %s74 = sadd.s32 %s73, 1
      %p77 = scmp.eq.s32.totalorder %s18, 1
      %p78 = scmp.ne.s32.totalorder %s73, %s75
      %p79 = scmp.eq.s32.totalorder %s18, 0
      %p80 = por %p78, %p79
      %p81 = scmp.ne.s32.totalorder %s73, %s75
      %p82 = scmp.eq.s32.totalorder %s23, 1
      %p83 = por %p81, %p82
      %p84 = scmp.ne.s32.totalorder %s75, %s76
      %p85 = scmp.eq.s32.totalorder %s23, 0
      %p86 = por %p84, %p85
      %p87 = scmp.ne.s32.totalorder %s75, %s76
      %p88 = scmp.eq.s32.totalorder %s24, 1
      %p89 = por %p87, %p88
      %p91 = scmp.ne.s32.totalorder %s76, %s90
      %p92 = scmp.eq.s32.totalorder %s24, 0
      %p93 = por %p91, %p92
      %s95 = sadd.s32 %s94, 1
      %p98 = scmp.eq.s32.totalorder %s18, 1
      %p99 = scmp.ne.s32.totalorder %s94, %s96
      %p100 = scmp.eq.s32.totalorder %s18, 0
      %p101 = por %p99, %p100
      %p102 = scmp.ne.s32.totalorder %s94, %s96
      %p103 = scmp.eq.s32.totalorder %s23, 1
      %p104 = por %p102, %p103
      %p105 = scmp.ne.s32.totalorder %s96, %s97
      %p106 = scmp.eq.s32.totalorder %s23, 0
      %p107 = por %p105, %p106
      %p108 = scmp.ne.s32.totalorder %s96, %s97
      %p109 = scmp.eq.s32.totalorder %s24, 1
      %p110 = por %p108, %p109
      %p112 = scmp.ne.s32.totalorder %s97, %s111
      %p113 = scmp.eq.s32.totalorder %s24, 0
      %p114 = por %p112, %p113
      %s116 = sadd.s32 %s115, 1
      %p119 = scmp.eq.s32.totalorder %s18, 1
      %p120 = scmp.ne.s32.totalorder %s115, %s117
      %p121 = scmp.eq.s32.totalorder %s18, 0
      %p122 = por %p120, %p121
      %p123 = scmp.ne.s32.totalorder %s115, %s117
      %p124 = scmp.eq.s32.totalorder %s23, 1
      %p125 = por %p123, %p124
      %p126 = scmp.ne.s32.totalorder %s117, %s118
      %p127 = scmp.eq.s32.totalorder %s23, 0
      %p128 = por %p126, %p127
      %p129 = scmp.ne.s32.totalorder %s117, %s118
      %p130 = scmp.eq.s32.totalorder %s24, 1
      %p131 = por %p129, %p130
      %p133 = scmp.ne.s32.totalorder %s118, %s132
      %p134 = scmp.eq.s32.totalorder %s24, 0
      %p135 = por %p133, %p134
      %s137 = sadd.s32 %s136, 1
      %p140 = scmp.eq.s32.totalorder %s18, 1
      %p141 = scmp.ne.s32.totalorder %s136, %s138
      %p142 = scmp.eq.s32.totalorder %s18, 0
      %p143 = por %p141, %p142
      %p144 = scmp.ne.s32.totalorder %s136, %s138
      %p145 = scmp.eq.s32.totalorder %s23, 1
      %p146 = por %p144, %p145
      %p147 = scmp.ne.s32.totalorder %s138, %s139
      %p148 = scmp.eq.s32.totalorder %s23, 0
      %p149 = por %p147, %p148
      %p150 = scmp.ne.s32.totalorder %s138, %s139
      %p151 = scmp.eq.s32.totalorder %s24, 1
      %p152 = por %p150, %p151
      %p154 = scmp.ne.s32.totalorder %s139, %s153
      %p155 = scmp.eq.s32.totalorder %s24, 0
      %p156 = por %p154, %p155
      %s158 = sadd.s32 %s157, 1
      %p161 = scmp.eq.s32.totalorder %s18, 1
      %p162 = scmp.ne.s32.totalorder %s157, %s159
      %p163 = scmp.eq.s32.totalorder %s18, 0
      %p164 = por %p162, %p163
      %p165 = scmp.ne.s32.totalorder %s157, %s159
      %p166 = scmp.eq.s32.totalorder %s23, 1
      %p167 = por %p165, %p166
      %p168 = scmp.ne.s32.totalorder %s159, %s160
      %p169 = scmp.eq.s32.totalorder %s23, 0
      %p170 = por %p168, %p169
      %p171 = scmp.ne.s32.totalorder %s159, %s160
      %p172 = scmp.eq.s32.totalorder %s24, 1
      %p173 = por %p171, %p172
      %p175 = scmp.ne.s32.totalorder %s160, %s174
      %p176 = scmp.eq.s32.totalorder %s24, 0
      %p177 = por %p175, %p176
      %s179 = sadd.s32 %s178, 1
      %p182 = scmp.eq.s32.totalorder %s18, 1
      %p183 = scmp.ne.s32.totalorder %s178, %s180
      %p184 = scmp.eq.s32.totalorder %s18, 0
      %p185 = por %p183, %p184
      %p186 = scmp.ne.s32.totalorder %s178, %s180
      %p187 = scmp.eq.s32.totalorder %s23, 1
      %p188 = por %p186, %p187
      %p189 = scmp.ne.s32.totalorder %s180, %s181
      %p190 = scmp.eq.s32.totalorder %s23, 0
      %p191 = por %p189, %p190
      %p192 = scmp.ne.s32.totalorder %s180, %s181
      %p193 = scmp.eq.s32.totalorder %s24, 1
      %p194 = por %p192, %p193
      %p196 = scmp.ne.s32.totalorder %s181, %s195
      %p197 = scmp.eq.s32.totalorder %s24, 0
      %p198 = por %p196, %p197
      %s200 = sadd.s32 %s199, 1
      %p203 = scmp.eq.s32.totalorder %s18, 1
      %p204 = scmp.ne.s32.totalorder %s199, %s201
      %p205 = scmp.eq.s32.totalorder %s18, 0
      %p206 = por %p204, %p205
      %p207 = scmp.ne.s32.totalorder %s199, %s201
      %p208 = scmp.eq.s32.totalorder %s23, 1
      %p209 = por %p207, %p208
      %p210 = scmp.ne.s32.totalorder %s201, %s202
      %p211 = scmp.eq.s32.totalorder %s23, 0
      %p212 = por %p210, %p211
      %p213 = scmp.ne.s32.totalorder %s201, %s202
      %p214 = scmp.eq.s32.totalorder %s24, 1
      %p215 = por %p213, %p214
      %p217 = scmp.ne.s32.totalorder %s202, %s216
      %p218 = scmp.eq.s32.totalorder %s24, 0
      %p219 = por %p217, %p218
      %s220 = ssub.s32 %s18, %s25
      %p221 = scmp.eq.s32.totalorder %s220, 0
      %s223 = sadd.s32 %s222, 1
      %s224 = scalar_select %p221, %s222, %s223
      %p227 = pneg %p221
      %p228 = scmp.eq.s32.totalorder %s18, 1
      %p229 = por %p227, %p228
      %p230 = scmp.ne.s32.totalorder %s222, %s225
      %p231 = scmp.eq.s32.totalorder %s18, 0
      %p232 = por %p230, %p231
      %p233 = scmp.ne.s32.totalorder %s222, %s225
      %p234 = scmp.eq.s32.totalorder %s23, 1
      %p235 = por %p233, %p234
      %p236 = scmp.ne.s32.totalorder %s225, %s226
      %p237 = scmp.eq.s32.totalorder %s23, 0
      %p238 = por %p236, %p237
      %p239 = scmp.ne.s32.totalorder %s225, %s226
      %p240 = scmp.eq.s32.totalorder %s24, 1
      %p241 = por %p239, %p240
      %p243 = scmp.ne.s32.totalorder %s226, %s242
      %p244 = scmp.eq.s32.totalorder %s24, 0
      %p245 = por %p243, %p244
      %p246 = scmp.le.s32.totalorder 1, %s18
      %p247 = scmp.lt.s32.totalorder %s18, 3
      %p248 = pnand %p246, %p247
      %p249 = pneg %p248
      // Predicated region
      $region9: #{block_forward.1} parent=5 // pred_check
        _
      $region10: #{block_forward.1} parent=5 // pred_check_branch
        %251 = sbr.rel (%p248) target = $region12
      $region11: #{block_forward.1} parent=5 // pred_region
        %s252 = ssub.s32 %s18, 1
        // Predicated region
        $region13: #{block_forward.1} parent=11 // pred_check
          %p253 = pneg %p65
        $region14: #{block_forward.1} parent=11 // pred_check_branch
          %255 = sbr.rel (%p253) target = $region16
        $region15: #{block_forward.1} parent=11 // pred_region
          _
        $region16: #{block_forward.1} parent=11 // pred_fallthru
          _
        // Predicated region
        $region17: #{block_forward.1} parent=11 // pred_check
          %p256 = pneg %p86
        $region18: #{block_forward.1} parent=11 // pred_check_branch
          %258 = sbr.rel (%p256) target = $region20
        $region19: #{block_forward.1} parent=11 // pred_region
          _
        $region20: #{block_forward.1} parent=11 // pred_fallthru
          _
        // Predicated region
        $region21: #{block_forward.1} parent=11 // pred_check
          %p259 = pneg %p107
        $region22: #{block_forward.1} parent=11 // pred_check_branch
          %261 = sbr.rel (%p259) target = $region24
        $region23: #{block_forward.1} parent=11 // pred_region
          _
        $region24: #{block_forward.1} parent=11 // pred_fallthru
          _
        // Predicated region
        $region25: #{block_forward.1} parent=11 // pred_check
          %p262 = pneg %p128
        $region26: #{block_forward.1} parent=11 // pred_check_branch
          %264 = sbr.rel (%p262) target = $region28
        $region27: #{block_forward.1} parent=11 // pred_region
          _
        $region28: #{block_forward.1} parent=11 // pred_fallthru
          _
        // Predicated region
        $region29: #{block_forward.1} parent=11 // pred_check
          %p265 = pneg %p149
        $region30: #{block_forward.1} parent=11 // pred_check_branch
          %267 = sbr.rel (%p265) target = $region32
        $region31: #{block_forward.1} parent=11 // pred_region
          _
        $region32: #{block_forward.1} parent=11 // pred_fallthru
          _
        // Predicated region
        $region33: #{block_forward.1} parent=11 // pred_check
          %p268 = pneg %p170
        $region34: #{block_forward.1} parent=11 // pred_check_branch
          %270 = sbr.rel (%p268) target = $region36
        $region35: #{block_forward.1} parent=11 // pred_region
          _
        $region36: #{block_forward.1} parent=11 // pred_fallthru
          _
        // Predicated region
        $region37: #{block_forward.1} parent=11 // pred_check
          %p271 = pneg %p191
        $region38: #{block_forward.1} parent=11 // pred_check_branch
          %273 = sbr.rel (%p271) target = $region40
        $region39: #{block_forward.1} parent=11 // pred_region
          _
        $region40: #{block_forward.1} parent=11 // pred_fallthru
          _
        // Predicated region
        $region41: #{block_forward.1} parent=11 // pred_check
          %p274 = pneg %p212
        $region42: #{block_forward.1} parent=11 // pred_check_branch
          %276 = sbr.rel (%p274) target = $region44
        $region43: #{block_forward.1} parent=11 // pred_region
          _
        $region44: #{block_forward.1} parent=11 // pred_fallthru
          _
      $region12: #{block_forward.1} parent=5 // pred_fallthru
        _
      %p277 = scmp.lt.s32.totalorder %s18, 2
      // Predicated region
      $region45: #{block_forward.1} parent=5 // pred_check
        %p278 = pneg %p277
      $region46: #{block_forward.1} parent=5 // pred_check_branch
        %280 = sbr.rel (%p278) target = $region48
      $region47: #{block_forward.1} parent=5 // pred_region
        // Predicated region
        $region49: #{block_forward.1} parent=47 // pred_check
          %p281 = pneg %p38
        $region50: #{block_forward.1} parent=47 // pred_check_branch
          %283 = sbr.rel (%p281) target = $region52
        $region51: #{block_forward.1} parent=47 // pred_region
          %p284 = scmp.lt.s32.totalorder %s18, 1
          %s285 = scalar_select %p284, %s18, 1
          %s286 = smul.addr %s285, 8
          %s287 = scalar_lea.vmem %s0, %s286
        $region52: #{block_forward.1} parent=47 // pred_fallthru
          _
      $region48: #{block_forward.1} parent=5 // pred_fallthru
        _
      %p288 = scmp.le.s32.totalorder 1, %s18
      %p289 = scmp.lt.s32.totalorder %s18, 3
      %p290 = pnand %p288, %p289
      %p291 = pneg %p290
      // Predicated region
      $region53: #{block_forward.1} parent=5 // pred_check
        _
      $region54: #{block_forward.1} parent=5 // pred_check_branch
        %293 = sbr.rel (%p290) target = $region56
      $region55: #{block_forward.1} parent=5 // pred_region
        %s294 = ssub.s32 %s18, 1
        %p295 = scmp.lt.s32.totalorder %s23, 1
        %s296 = scalar_select %p295, %s23, 1
        %s297 = smul.addr %s296, 8
        %s298 = scalar_lea.vmem %s0, %s297
        %p299 = pneg %p44
        %p300 = pneg %p41
        %p301 = pneg %p65
        %p302 = pneg %p62
        %p303 = pneg %p86
        %p304 = pneg %p83
        %p305 = pneg %p107
        %p306 = pneg %p104
        %p307 = pneg %p128
        %p308 = pneg %p125
        %p309 = pneg %p149
        %p310 = pneg %p146
        %p311 = pneg %p170
        %p312 = pneg %p167
        %p313 = pneg %p191
        %p314 = pneg %p188
        %p315 = pneg %p212
        %p316 = pneg %p209
        %p317 = pneg %p238
        %p318 = pneg %p235
        %s319 = sand.u32 %s225, 1
        %s320 = scalar_lea.sflag [#allocation3], %s319
        %s321 = sand.u32 %s225, 1
        %s322 = smul.addr %s321, 8
        %s323 = scalar_lea.vmem [#allocation2], %s322
        %p324 = scmp.lt.s32.totalorder %s23, 1
        %s325 = scalar_select %p324, %s23, 1
        %s326 = smul.addr %s325, 8
        %s327 = scalar_lea.vmem %s0, %s326
        %v328 = vld [vmem:[%s327] sm:$0xff]
        %v329 = vmul.f32 %v328, %v328
        %vm330 = vcmask 261120
        %v331 = vsel %vm330, %v329, 0.0
        %332 = vadd.xlane.f32.xlu0 %v331
        %v333 = vpop.xlane.xlu0 %332
        %v334 = vrcp.pop 32.0
        %v335 = vmul.f32 %v333, %v334
        %v336 = vadd.f32 %v335, 1.1920929e-07
        %v337 = vrsqrt.pop %v336
        %v338 = vmul.f32 %v328, %v337
        %v339 = vld [vmem:[%s3] sm:$0x1]
        %v341 = vlaneseq
        %v342 = vshrl.u32 %v341, 7
        %v343 = vsub.s32 0, %v342
        %v344 = vrot.slane %v339, %v343
        %v346 = vmul.f32 %v338, %v344
        %v347 = vld [vmem:[%s1] sm:$0xff]
        %vm348 = vcmask 64512
        %v350 = vsel %vm348, %v347, 0
        %352 = vmatprep.subr.mxu0 0.0
        %353 = vmatpush1.msra.mxu0 %v346
        %354 = vmatprep.subr.mxu0 0.0
        %355 = vmatpush1.msra.mxu0 0.0
        %356 = vmatprep.subr.mxu0 0.0
        %357 = vmatpush1.msra.mxu0 0.0
        %358 = vmatprep.subr.mxu0 0.0
        %359 = vmatpush1.msra.mxu0 0.0
        %360 = vmatprep.subr.mxu0 0.0
        %361 = vmatpush1.msra.mxu0 0.0
        %362 = vmatprep.subr.mxu0 0.0
        %363 = vmatpush1.msra.mxu0 0.0
        %364 = vmatprep.subr.mxu0 0.0
        %365 = vmatpush1.msra.mxu0 0.0
        %366 = vmatprep.subr.mxu0 0.0
        %367 = vmatpush1.msra.mxu0 0.0
        %368 = vmatprep.subr.mxu0 0.0
        %369 = vmatpush1.msra.mxu0 0.0
        %370 = vmatprep.subr.mxu0 0.0
        %371 = vmatpush1.msra.mxu0 0.0
        %372 = vmatprep.subr.mxu0 0.0
        %373 = vmatpush1.msra.mxu0 0.0
        %374 = vmatprep.subr.mxu0 0.0
        %375 = vmatpush1.msra.mxu0 0.0
        %376 = vmatprep.subr.mxu0 0.0
        %377 = vmatpush1.msra.mxu0 0.0
        %378 = vmatprep.subr.mxu0 0.0
        %379 = vmatpush1.msra.mxu0 0.0
        %380 = vmatprep.subr.mxu0 0.0
        %381 = vmatpush1.msra.mxu0 0.0
        %382 = vmatprep.subr.mxu0 0.0
        %383 = vmatpush1.msra.mxu0 0.0
        %384 = vmatprep.subr.mxu0 0.0
        %385 = vmatpush1.msra.mxu0 0.0
        %386 = vmatprep.subr.mxu0 0.0
        %387 = vmatpush1.msra.mxu0 0.0
        %388 = vmatprep.subr.mxu0 0.0
        %389 = vmatpush1.msra.mxu0 0.0
        %390 = vmatprep.subr.mxu0 0.0
        %391 = vmatpush1.msra.mxu0 0.0
        %392 = vmatprep.subr.mxu0 0.0
        %393 = vmatpush1.msra.mxu0 0.0
        %394 = vmatprep.subr.mxu0 0.0
        %395 = vmatpush1.msra.mxu0 0.0
        %396 = vmatprep.subr.mxu0 0.0
        %397 = vmatpush1.msra.mxu0 0.0
        %398 = vmatprep.subr.mxu0 0.0
        %399 = vmatpush1.msra.mxu0 0.0
        %400 = vmatprep.subr.mxu0 0.0
        %401 = vmatpush1.msra.mxu0 0.0
        %402 = vmatprep.subr.mxu0 0.0
        %403 = vmatpush1.msra.mxu0 0.0
        %404 = vmatprep.subr.mxu0 0.0
        %405 = vmatpush1.msra.mxu0 0.0
        %406 = vmatprep.subr.mxu0 0.0
        %407 = vmatpush1.msra.mxu0 0.0
        %408 = vmatprep.subr.mxu0 0.0
        %409 = vmatpush1.msra.mxu0 0.0
        %410 = vmatprep.subr.mxu0 0.0
        %411 = vmatpush1.msra.mxu0 0.0
        %412 = vmatprep.subr.mxu0 0.0
        %413 = vmatpush1.msra.mxu0 0.0
        %414 = vmatprep.subr.mxu0 0.0
        %415 = vmatpush1.msra.mxu0 0.0
        %416 = vmatprep.mubr.f32.mxu0 0.0
        %417 = vmatmul.mubr.f32.gmra.mrb[0].mxu0 %v350
        %v418 = vpop.f32.mrb[0].mxu0
        %v419 = vadd.f32 0.0, %v418
        %v420 = vpop.f32.mrb[0].mxu0
        %421 = vdwg.mxu0
        %v422 = vadd.f32 %v328, %v419
        %v423 = vld [vmem:[%s2] sm:$0xff]
        %425 = vset.pattern.permute.xlu0 0
        %426 = vperm.xlu0 %425, %v423
        %v427 = vpop.permute.xlu0 %426
        %v429 = vadd.f32 %v422, %v427
        %430 = vst.msk [vmem:[%s323] sm:$0xff] %vm330, %v429
        %v431 = vld [vmem:[%s323] sm:$0xff]
        %v432 = vmul.f32 %v431, %v431
        %v433 = vsel %vm330, %v432, 0.0
        %434 = vadd.xlane.f32.xlu0 %v433
        %v435 = vpop.xlane.xlu0 %434
        %v436 = vmul.f32 %v435, %v334
        %v437 = vadd.f32 %v436, 1.1920929e-07
        %v438 = vrsqrt.pop %v437
        %v439 = vmul.f32 %v431, %v438
        %v440 = vld [vmem:[%s4] sm:$0x1]
        %v442 = vlaneseq
        %v443 = vshrl.u32 %v442, 7
        %v444 = vsub.s32 0, %v443
        %v445 = vrot.slane %v440, %v444
        %v447 = vmul.f32 %v439, %v445
        %v448 = vld [vmem:[%s5] sm:$0xff]
        %v449 = vld [vmem:[%s5 + $0x8] sm:$0xff]
        %v450 = vld [vmem:[%s5 + $0x10] sm:$0xff]
        %v451 = vld [vmem:[%s5 + $0x18] sm:$0xff]
        %v452 = vld [vmem:[%s6] sm:$0x1]
        %v454 = vlaneseq
        %v455 = vshrl.u32 %v454, 7
        %v456 = vsub.s32 0, %v455
        %v457 = vrot.slane %v452, %v456
        %v460 = vsel %vm330, %v447, 0
        %462 = vmatprep.subr.mxu0 0.0
        %463 = vmatpush1.msra.mxu0 %v448
        %464 = vmatprep.subr.mxu0 0.0
        %465 = vmatpush1.msra.mxu0 %v449
        %466 = vmatprep.subr.mxu0 0.0
        %467 = vmatpush1.msra.mxu0 %v450
        %468 = vmatprep.subr.mxu0 0.0
        %469 = vmatpush1.msra.mxu0 %v451
        %470 = vmatprep.subr.mxu0 0.0
        %471 = vmatpush1.msra.mxu0 0.0
        %472 = vmatprep.subr.mxu0 0.0
        %473 = vmatpush1.msra.mxu0 0.0
        %474 = vmatprep.subr.mxu0 0.0
        %475 = vmatpush1.msra.mxu0 0.0
        %476 = vmatprep.subr.mxu0 0.0
        %477 = vmatpush1.msra.mxu0 0.0
        %478 = vmatprep.subr.mxu0 0.0
        %479 = vmatpush1.msra.mxu0 0.0
        %480 = vmatprep.subr.mxu0 0.0
        %481 = vmatpush1.msra.mxu0 0.0
        %482 = vmatprep.subr.mxu0 0.0
        %483 = vmatpush1.msra.mxu0 0.0
        %484 = vmatprep.subr.mxu0 0.0
        %485 = vmatpush1.msra.mxu0 0.0
        %486 = vmatprep.subr.mxu0 0.0
        %487 = vmatpush1.msra.mxu0 0.0
        %488 = vmatprep.subr.mxu0 0.0
        %489 = vmatpush1.msra.mxu0 0.0
        %490 = vmatprep.subr.mxu0 0.0
        %491 = vmatpush1.msra.mxu0 0.0
        %492 = vmatprep.subr.mxu0 0.0
        %493 = vmatpush1.msra.mxu0 0.0
        %494 = vmatprep.subr.mxu0 0.0
        %495 = vmatpush1.msra.mxu0 0.0
        %496 = vmatprep.subr.mxu0 0.0
        %497 = vmatpush1.msra.mxu0 0.0
        %498 = vmatprep.subr.mxu0 0.0
        %499 = vmatpush1.msra.mxu0 0.0
        %500 = vmatprep.subr.mxu0 0.0
        %501 = vmatpush1.msra.mxu0 0.0
        %502 = vmatprep.subr.mxu0 0.0
        %503 = vmatpush1.msra.mxu0 0.0
        %504 = vmatprep.subr.mxu0 0.0
        %505 = vmatpush1.msra.mxu0 0.0
        %506 = vmatprep.subr.mxu0 0.0
        %507 = vmatpush1.msra.mxu0 0.0
        %508 = vmatprep.subr.mxu0 0.0
        %509 = vmatpush1.msra.mxu0 0.0
        %510 = vmatprep.subr.mxu0 0.0
        %511 = vmatpush1.msra.mxu0 0.0
        %512 = vmatprep.subr.mxu0 0.0
        %513 = vmatpush1.msra.mxu0 0.0
        %514 = vmatprep.subr.mxu0 0.0
        %515 = vmatpush1.msra.mxu0 0.0
        %516 = vmatprep.subr.mxu0 0.0
        %517 = vmatpush1.msra.mxu0 0.0
        %518 = vmatprep.subr.mxu0 0.0
        %519 = vmatpush1.msra.mxu0 0.0
        %520 = vmatprep.subr.mxu0 0.0
        %521 = vmatpush1.msra.mxu0 0.0
        %522 = vmatprep.subr.mxu0 0.0
        %523 = vmatpush1.msra.mxu0 0.0
        %524 = vmatprep.subr.mxu0 0.0
        %525 = vmatpush1.msra.mxu0 0.0
        %526 = vmatprep.mubr.f32.mxu0 0.0
        %527 = vmatmul.mubr.f32.gmra.mrb[0].mxu0 %v460
        %v528 = vpop.f32.mrb[0].mxu0
        %v529 = vadd.f32 %v457, %v528
        %v530 = vpop.f32.mrb[0].mxu0
        %531 = vdwg.mxu0
        %v532 = vxor.u32 %v529, 2147483648
        %v533 = vmul.f32 %v532, 1.442695
        %v534 = vpow.pop %v533
        %v535 = vadd.f32 %v534, 1.0
        %v536 = vrcp.pop %v535
        %v537 = vmul.f32 1.0, %v536
        %v538 = vmul.f32 %v529, %v537
        %v539 = vld [vmem:[%s7] sm:$0xff]
        %v540 = vld [vmem:[%s7 + $0x8] sm:$0xff]
        %v541 = vld [vmem:[%s7 + $0x10] sm:$0xff]
        %v542 = vld [vmem:[%s7 + $0x18] sm:$0xff]
        %v543 = vld [vmem:[%s7 + $0x20] sm:$0xff]
        %v544 = vld [vmem:[%s7 + $0x28] sm:$0xff]
        %v545 = vld [vmem:[%s7 + $0x30] sm:$0xff]
        %v546 = vld [vmem:[%s7 + $0x38] sm:$0xff]
        %v547 = vld [vmem:[%s7 + $0x40] sm:$0xff]
        %v548 = vld [vmem:[%s7 + $0x48] sm:$0xff]
        %v549 = vld [vmem:[%s7 + $0x50] sm:$0xff]
        %v550 = vld [vmem:[%s7 + $0x58] sm:$0xff]
        %v551 = vld [vmem:[%s7 + $0x60] sm:$0xff]
        %v552 = vld [vmem:[%s7 + $0x68] sm:$0xff]
        %v553 = vld [vmem:[%s7 + $0x70] sm:$0xff]
        %v554 = vld [vmem:[%s7 + $0x78] sm:$0xff]
        %555 = vmatprep.subr.mxu0 0.0
        %556 = vmatpush1.msra.mxu0 %v539
        %557 = vmatprep.subr.mxu0 0.0
        %558 = vmatpush1.msra.mxu0 %v540
        %559 = vmatprep.subr.mxu0 0.0
        %560 = vmatpush1.msra.mxu0 %v541
        %561 = vmatprep.subr.mxu0 0.0
        %562 = vmatpush1.msra.mxu0 %v542
        %563 = vmatprep.subr.mxu0 0.0
        %564 = vmatpush1.msra.mxu0 %v543
        %565 = vmatprep.subr.mxu0 0.0
        %566 = vmatpush1.msra.mxu0 %v544
        %567 = vmatprep.subr.mxu0 0.0
        %568 = vmatpush1.msra.mxu0 %v545
        %569 = vmatprep.subr.mxu0 0.0
        %570 = vmatpush1.msra.mxu0 %v546
        %571 = vmatprep.subr.mxu0 0.0
        %572 = vmatpush1.msra.mxu0 %v547
        %573 = vmatprep.subr.mxu0 0.0
        %574 = vmatpush1.msra.mxu0 %v548
        %575 = vmatprep.subr.mxu0 0.0
        %576 = vmatpush1.msra.mxu0 %v549
        %577 = vmatprep.subr.mxu0 0.0
        %578 = vmatpush1.msra.mxu0 %v550
        %579 = vmatprep.subr.mxu0 0.0
        %580 = vmatpush1.msra.mxu0 %v551
        %581 = vmatprep.subr.mxu0 0.0
        %582 = vmatpush1.msra.mxu0 %v552
        %583 = vmatprep.subr.mxu0 0.0
        %584 = vmatpush1.msra.mxu0 %v553
        %585 = vmatprep.subr.mxu0 0.0
        %586 = vmatpush1.msra.mxu0 %v554
        %587 = vmatprep.subr.mxu0 0.0
        %588 = vmatpush1.msra.mxu0 0.0
        %589 = vmatprep.subr.mxu0 0.0
        %590 = vmatpush1.msra.mxu0 0.0
        %591 = vmatprep.subr.mxu0 0.0
        %592 = vmatpush1.msra.mxu0 0.0
        %593 = vmatprep.subr.mxu0 0.0
        %594 = vmatpush1.msra.mxu0 0.0
        %595 = vmatprep.subr.mxu0 0.0
        %596 = vmatpush1.msra.mxu0 0.0
        %597 = vmatprep.subr.mxu0 0.0
        %598 = vmatpush1.msra.mxu0 0.0
        %599 = vmatprep.subr.mxu0 0.0
        %600 = vmatpush1.msra.mxu0 0.0
        %601 = vmatprep.subr.mxu0 0.0
        %602 = vmatpush1.msra.mxu0 0.0
        %603 = vmatprep.subr.mxu0 0.0
        %604 = vmatpush1.msra.mxu0 0.0
        %605 = vmatprep.subr.mxu0 0.0
        %606 = vmatpush1.msra.mxu0 0.0
        %607 = vmatprep.subr.mxu0 0.0
        %608 = vmatpush1.msra.mxu0 0.0
        %609 = vmatprep.subr.mxu0 0.0
        %610 = vmatpush1.msra.mxu0 0.0
        %611 = vmatprep.subr.mxu0 0.0
        %612 = vmatpush1.msra.mxu0 0.0
        %613 = vmatprep.subr.mxu0 0.0
        %614 = vmatpush1.msra.mxu0 0.0
        %615 = vmatprep.subr.mxu0 0.0
        %616 = vmatpush1.msra.mxu0 0.0
        %617 = vmatprep.subr.mxu0 0.0
        %618 = vmatpush1.msra.mxu0 0.0
        %619 = vmatprep.mubr.f32.mxu0 0.0
        %620 = vmatmul.mubr.f32.gmra.mrb[0].mxu0 %v538
        %v621 = vpop.f32.mrb[0].mxu0
        %v622 = vadd.f32 0.0, %v621
        %v623 = vpop.f32.mrb[0].mxu0
        %624 = vdwg.mxu0
        %v625 = vadd.f32 %v431, %v622
        %v626 = vld [vmem:[%s8] sm:$0x1]
        %v628 = vlaneseq
        %v629 = vshrl.u32 %v628, 7
        %v630 = vsub.s32 0, %v629
        %v631 = vrot.slane %v626, %v630
        %v633 = vadd.f32 %v625, %v631
        %634 = vst.msk [vmem:[%s323] sm:$0xff] %vm330, %v633
        %s635 = sand.u32 %s225, 1
        %s636 = scalar_lea.sflag [#allocation3], %s635
        %s637 = sand.u32 %s225, 1
        %s638 = smul.addr %s637, 8
        %s639 = scalar_lea.vmem [#allocation2], %s638
        // Predicated region
        $region57: #{block_forward.1} parent=55 // pred_check
          %p640 = pneg %p235
        $region58: #{block_forward.1} parent=55 // pred_check_branch
          %642 = sbr.rel (%p640) target = $region60
        $region59: #{block_forward.1} parent=55 // pred_region
          %s644 = ssub.s32 128, 128
          %645 = vsyncadd %s636, %s644
          %s646 = smul.addr %s23, 128
          %s647 = scalar_lea.hbm %s9, %s646
          %s649 = sshll.u32 %s639, 4
          %s650 = int_to_ptr.vmem [resolvable:$true] %s649
          %652 = dma.vmem_to_hbm [thread:$0]  %s650, 128, %s647, %s636
        $region60: #{block_forward.1} parent=55 // pred_fallthru
          _
      $region56: #{block_forward.1} parent=5 // pred_fallthru
        _
      %p653 = scmp.le.s32.totalorder 2, %s18
      // Predicated region
      $region61: #{block_forward.1} parent=5 // pred_check
        %p654 = pneg %p653
      $region62: #{block_forward.1} parent=5 // pred_check_branch
        %656 = sbr.rel (%p654) target = $region64
      $region63: #{block_forward.1} parent=5 // pred_region
        %s657 = ssub.s32 %s18, 2
        // Predicated region
        $region65: #{block_forward.1} parent=63 // pred_check
          %p658 = pneg %p241
        $region66: #{block_forward.1} parent=63 // pred_check_branch
          %660 = sbr.rel (%p658) target = $region68
        $region67: #{block_forward.1} parent=63 // pred_region
          %s661 = sand.u32 %s226, 1
          %s662 = scalar_lea.sflag [#allocation3], %s661
          %s663 = sand.u32 %s226, 1
          %s664 = smul.addr %s663, 8
          %s665 = scalar_lea.vmem [#allocation2], %s664
          %666 = dma.done %s662, 128
        $region68: #{block_forward.1} parent=63 // pred_fallthru
          _
      $region64: #{block_forward.1} parent=5 // pred_fallthru
        _
    $region6: #{block_forward.1} parent=1 // loop_footer
      %s22 = sadd.s32 1, %s18
    $region7: #{block_forward.1} parent=1 // loop_footer_branch
      %17 = sbr.rel target = $region3
    $region8: #{block_forward.1} parent=1 // loop_exit
      _
    %667 = vsyncpa [#allocation3], 1
    %s668 = scalar_lea.sflag [#allocation3], 1
    %669 = vsyncpa %s668, 1

</llo_original>
